<compile_context>
chip_gen: v6e
topology: v6e:2x2x1
jax: 0.10.0
libtpu: 0.0.40
codegen_flags: <defaults>
</compile_context>

<pallas_src>
import jax
import jax.numpy as jnp
import numpy as np
from jax.experimental import pallas as pl
from jax.experimental.pallas import tpu as pltpu


# ----------------------------------------------------------------------------
# Parameter construction (deterministic, synthetic) + BN folding
# ----------------------------------------------------------------------------
class _KeyGen:
    def __init__(self, key):
        self.key = key

    def __call__(self):
        self.key, sub = jax.random.split(self.key)
        return sub


def _fold_bn(w_oihw, gamma, beta, mean, var, eps=1e-5):
    """Fold inference-mode BN into the preceding (bias-free) conv.

    Folded weights are rounded once to bf16 precision (kept as f32) so the Pallas
    bf16-MXU path and the f32 reference share identical weights."""
    scale = gamma / jnp.sqrt(var + eps)                  # (O,)
    w_f = w_oihw * scale[:, None, None, None]
    w_f = w_f.astype(jnp.bfloat16).astype(jnp.float32)
    b_f = beta - mean * scale
    return w_f, b_f.astype(jnp.float32)


def _conv_bn(kg, out_ch, in_ch, ksize):
    w = 0.2 * jax.random.normal(kg(), (out_ch, in_ch, ksize, ksize), jnp.float32)
    gamma = 1.0 + 0.1 * jax.random.normal(kg(), (out_ch,), jnp.float32)
    beta = 0.1 * jax.random.normal(kg(), (out_ch,), jnp.float32)
    mean = 0.1 * jax.random.normal(kg(), (out_ch,), jnp.float32)
    var = jax.random.uniform(kg(), (out_ch,), jnp.float32, 0.5, 1.5)
    return _fold_bn(w, gamma, beta, mean, var)


def init_csp_params(key, in_channels, out_channels, num_blocks=3, widen_factor=1.0):
    hidden = int(out_channels * widen_factor)
    kg = _KeyGen(key)

    conv1_w, conv1_b = _conv_bn(kg, hidden, in_channels, 1)
    conv2_w, conv2_b = _conv_bn(kg, hidden, in_channels, 1)

    blk3_w, blk3_b, blk1_w, blk1_b = [], [], [], []
    for _ in range(num_blocks):
        w3, b3 = _conv_bn(kg, hidden, hidden, 3)   # RepVGG branch_3x3 (+BN)
        w1, b1 = _conv_bn(kg, hidden, hidden, 1)   # RepVGG branch_1x1 (+BN)
        blk3_w.append(w3); blk3_b.append(b3)
        blk1_w.append(w1); blk1_b.append(b1)

    params = dict(
        num_blocks=num_blocks,
        has_conv3=(hidden != out_channels),
        hidden=hidden,
        out_channels=out_channels,
        conv1_w=conv1_w, conv1_b=conv1_b,
        conv2_w=conv2_w, conv2_b=conv2_b,
        blk3_w=jnp.stack(blk3_w), blk3_b=jnp.stack(blk3_b),
        blk1_w=jnp.stack(blk1_w), blk1_b=jnp.stack(blk1_b),
    )
    if params["has_conv3"]:
        w, b = _conv_bn(kg, out_channels, hidden, 1)
        params["conv3_w"], params["conv3_b"] = w, b
    return params


# ----------------------------------------------------------------------------
# Host-side weight / mask prep
# ----------------------------------------------------------------------------
def _prep_weights(params):
    nb = params["num_blocks"]
    Ch = params["hidden"]
    has_conv3 = params["has_conv3"]
    Cout = params["out_channels"] if has_conv3 else Ch

    # conv1 | conv2 fused along the output-channel axis: (2Ch, Cin)
    w12 = jnp.concatenate([params["conv1_w"][:, :, 0, 0],
                           params["conv2_w"][:, :, 0, 0]], axis=0).astype(jnp.bfloat16)
    b12 = jnp.concatenate([params["conv1_b"], params["conv2_b"]]).reshape(2 * Ch, 1)

    # RepVGG re-parameterization: fold the 1x1 branch into the 3x3 centre tap
    w3 = params["blk3_w"].at[:, :, :, 1, 1].add(params["blk1_w"][:, :, :, 0, 0])
    b3 = (params["blk3_b"] + params["blk1_b"]).reshape(nb, Ch, 1)
    # (NB, O, I, 3, 3) -> (NB, O, kh, kw, I) -> (NB, O, 9*I): rows ordered (kh, kw, i)
    w3 = jnp.transpose(w3, (0, 1, 3, 4, 2)).reshape(nb, Ch, 9 * Ch).astype(jnp.bfloat16)

    prep = dict(w12=w12, b12=b12, w3=w3, b3=b3, Cout=Cout)
    if has_conv3:
        prep["wc3"] = params["conv3_w"][:, :, 0, 0].astype(jnp.bfloat16)   # (Cout, Ch)
        prep["bc3"] = params["conv3_b"].reshape(Cout, 1)
    return prep


def _tap_masks(H, W):
    """(9, 1, H*W) multiplicative 0/1 masks implementing the implicit zero padding
    of a 3x3 'same' conv when taps are built as lane shifts of the flat (C, H*W) slab."""
    HW = H * W
    h = np.arange(HW) // W
    w = np.arange(HW) % W
    m = np.ones((9, 1, HW), np.float32)
    for kh in range(3):
        for kw in range(3):
            valid = np.ones(HW, bool)
            if kh == 0:
                valid &= h >= 1
            if kh == 2:
                valid &= h <= H - 2
            if kw == 0:
                valid &= w >= 1
            if kw == 2:
                valid &= w <= W - 2
            m[kh * 3 + kw, 0] = valid.astype(np.float32)
    return jnp.asarray(m)


# ----------------------------------------------------------------------------
# Pallas kernel: full CSPRepLayer forward for one batch element per grid step
# ----------------------------------------------------------------------------
def _make_csp_kernel(H, W, Cin, Ch, Cout, num_blocks, has_conv3):
    HW = H * W

    def shift_lanes(x, delta):
        # result[:, f] = x[:, f + delta] wherever the source index is in range
        # (out-of-range lanes wrap around and are zeroed by the tap mask).
        d = delta % HW
        if d == 0:
            return x
        return jnp.concatenate([x[:, d:], x[:, :d]], axis=1)

    def kernel(x_ref, w12_ref, b12_ref, w3_ref, b3_ref, tmask_ref, *rest):
        if has_conv3:
            wc3_ref, bc3_ref, o_ref = rest
        else:
            (o_ref,) = rest

        # --- fused conv1 | conv2: (2Ch, Cin) @ (Cin, HW) bf16 matmul, f32 accumulate
        h12 = jnp.dot(w12_ref[...], x_ref[0],
                      preferred_element_type=jnp.float32)
        h12 = jnp.maximum(h12 + b12_ref[...], 0.0)            # (2Ch, HW) f32
        h1 = h12[:Ch]
        h2 = h12[Ch:]

        tmask = tmask_ref[...]                                 # (9, 1, HW) f32

        # --- RepVGG bottlenecks (1x1 branch pre-folded into the 3x3 centre tap):
        # 3x3 "same" conv as 9 static lane shifts + boundary mask, stacked along
        # sublanes into (9*Ch, HW) and fed to a single MXU matmul per block.
        for k in range(num_blocks):
            taps = []
            for kh in range(3):
                for kw in range(3):
                    t = shift_lanes(h1, (kh - 1) * W + (kw - 1))
                    if kh != 1 or kw != 1:
                        t = t * tmask[kh * 3 + kw]             # (1, HW) broadcast
                    taps.append(t)
            pmat = jnp.concatenate(taps, axis=0)               # (9*Ch, HW) f32
            y3 = jnp.dot(w3_ref[k], pmat.astype(jnp.bfloat16),
                         preferred_element_type=jnp.float32) + b3_ref[k]
            h1 = jnp.maximum(y3, 0.0)

        # --- cross-stage add (+ optional 1x1 ConvModule)
        y = h1 + h2
        if has_conv3:
            y = jnp.dot(wc3_ref[...], y.astype(jnp.bfloat16),
                        preferred_element_type=jnp.float32) + bc3_ref[...]
            y = jnp.maximum(y, 0.0)

        # lane-dense store: (Cout, HW) slab, HW on the lane axis
        o_ref[0] = y.astype(o_ref.dtype)

    return kernel


def csp_rep_layer_pallas(x_nchw, params):
    """Forward pass matching CSPRepLayer.forward; input/output are NCHW (PyTorch layout,
    consumed natively: channels on sublanes, H*W on lanes — no transposes needed)."""
    num_blocks = params["num_blocks"]
    has_conv3 = params["has_conv3"]
    B, Cin, H, W = x_nchw.shape
    Ch = params["hidden"]
    HW = H * W
    p = _prep_weights(params)
    Cout = p["Cout"]

    x = x_nchw.astype(jnp.bfloat16).reshape(B, Cin, HW)
    tmask = _tap_masks(H, W)

    args = [x, p["w12"], p["b12"], p["w3"], p["b3"], tmask]
    if has_conv3:
        args += [p["wc3"], p["bc3"]]

    kernel = _make_csp_kernel(H, W, Cin, Ch, Cout, num_blocks, has_conv3)

    def full_spec(a):
        return pl.BlockSpec(a.shape, lambda b, _n=a.ndim: (0,) * _n)

    in_specs = [pl.BlockSpec((1, Cin, HW), lambda b: (b, 0, 0))]
    in_specs += [full_spec(a) for a in args[1:]]
    out_spec = pl.BlockSpec((1, Cout, HW), lambda b: (b, 0, 0))

    y = pl.pallas_call(
        kernel,
        out_shape=jax.ShapeDtypeStruct((B, Cout, HW), jnp.float32),
        grid=(B,),
        in_specs=in_specs,
        out_specs=out_spec,
        compiler_params=pltpu.CompilerParams(dimension_semantics=("parallel",)),
    )(*args)

    return y.reshape(B, Cout, H, W)


# ----------------------------------------------------------------------------
# Pure-JAX reference (lax.conv, f32, un-fused) for correctness check
# ----------------------------------------------------------------------------
def _conv_nhwc_ref(x, w_oihw, bias, padding, act):
    w = jnp.transpose(w_oihw, (2, 3, 1, 0))  # HWIO
    y = jax.lax.conv_general_dilated(
        x, w, window_strides=(1, 1), padding=padding,
        dimension_numbers=("NHWC", "HWIO", "NHWC"))
    y = y + bias.reshape(1, 1, 1, -1)
    return jnp.maximum(y, 0.0) if act else y


def csp_rep_layer_ref(x_nchw, p):
    x = jnp.transpose(x_nchw, (0, 2, 3, 1)).astype(jnp.float32)
    x1 = _conv_nhwc_ref(x, p["conv1_w"], p["conv1_b"], "VALID", True)
    x2 = _conv_nhwc_ref(x, p["conv2_w"], p["conv2_b"], "VALID", True)
    for k in range(p["num_blocks"]):
        y3 = _conv_nhwc_ref(x1, p["blk3_w"][k], p["blk3_b"][k], "SAME", False)
        y1 = _conv_nhwc_ref(x1, p["blk1_w"][k], p["blk1_b"][k], "VALID", False)
        x1 = jnp.maximum(y3 + y1, 0.0)
    y = x1 + x2
    if p["has_conv3"]:
        y = _conv_nhwc_ref(y, p["conv3_w"], p["conv3_b"], "VALID", True)
    return jnp.transpose(y, (0, 3, 1, 2))


# ----------------------------------------------------------------------------
if __name__ == "__main__":
    key = jax.random.PRNGKey(0)
    x = jax.random.normal(key, (2, 4, 16, 16), jnp.float32)   # NCHW: B=2, Cin=4, 16x16

    # Config 1: widen_factor=1.0 -> hidden == out -> conv3 = Identity
    p1 = init_csp_params(jax.random.PRNGKey(1), in_channels=4, out_channels=8,
                         num_blocks=3, widen_factor=1.0)
    y1 = csp_rep_layer_pallas(x, p1)
    jax.block_until_ready(y1)
    r1 = csp_rep_layer_ref(x, p1)
    assert y1.shape == (2, 8, 16, 16)
    np.testing.assert_allclose(np.asarray(y1), np.asarray(r1), rtol=5e-2, atol=5e-2)

    # Config 2: widen_factor=0.5 -> hidden != out -> conv3 (1x1 ConvModule) present
    p2 = init_csp_params(jax.random.PRNGKey(2), in_channels=4, out_channels=8,
                         num_blocks=2, widen_factor=0.5)
    y2 = csp_rep_layer_pallas(x, p2)
    jax.block_until_ready(y2)
    r2 = csp_rep_layer_ref(x, p2)
    assert y2.shape == (2, 8, 16, 16)
    np.testing.assert_allclose(np.asarray(y2), np.asarray(r2), rtol=5e-2, atol=5e-2)

    print("KERNEL_OK")
</pallas_src>

<mosaic_0001>
module attributes {stable_mosaic.version = 11 : i64} {
  func.func @kernel(%arg0: i32, %arg1: memref<1x4x256xbf16, #tpu.memory_space<vmem>>, %arg2: memref<16x4xbf16, #tpu.memory_space<vmem>>, %arg3: memref<16x1xf32, #tpu.memory_space<vmem>>, %arg4: memref<3x8x72xbf16, #tpu.memory_space<vmem>>, %arg5: memref<3x8x1xf32, #tpu.memory_space<vmem>>, %arg6: memref<9x1x256xf32, #tpu.memory_space<vmem>>, %arg7: memref<1x8x256xf32, #tpu.memory_space<vmem>>) attributes {dimension_semantics = [#tpu.dimension_semantics<parallel>], iteration_bounds = array<i64: 2>, scalar_prefetch = 0 : i64, scratch_operands = 0 : i64, tpu.core_type = #tpu.core_type<tc>, window_params = [{transform_indices = @transform_0, window_bounds = array<i64: 1, 4, 256>}, {pipeline_mode = #tpu.pipeline_mode<synchronous>, transform_indices = @transform_1, window_bounds = array<i64: 16, 4>}, {pipeline_mode = #tpu.pipeline_mode<synchronous>, transform_indices = @transform_2, window_bounds = array<i64: 16, 1>}, {pipeline_mode = #tpu.pipeline_mode<synchronous>, transform_indices = @transform_3, window_bounds = array<i64: 3, 8, 72>}, {pipeline_mode = #tpu.pipeline_mode<synchronous>, transform_indices = @transform_4, window_bounds = array<i64: 3, 8, 1>}, {pipeline_mode = #tpu.pipeline_mode<synchronous>, transform_indices = @transform_5, window_bounds = array<i64: 9, 1, 256>}, {transform_indices = @transform_6, window_bounds = array<i64: 1, 8, 256>}]} {
    %c0 = arith.constant 0 : index
    %c0_0 = arith.constant 0 : index
    %0 = vector.load %arg2[%c0, %c0_0] : memref<16x4xbf16, #tpu.memory_space<vmem>>, vector<16x4xbf16>
    %c0_1 = arith.constant 0 : index
    %c0_2 = arith.constant 0 : index
    %c0_3 = arith.constant 0 : index
    %1 = vector.load %arg1[%c0_1, %c0_2, %c0_3] : memref<1x4x256xbf16, #tpu.memory_space<vmem>>, vector<1x4x256xbf16>
    %2 = vector.shape_cast %1 : vector<1x4x256xbf16> to vector<4x256xbf16>
    %cst = arith.constant dense<0.000000e+00> : vector<16x256xf32>
    %3 = tpu.matmul %0, %2, %cst {dimension_numbers = #tpu.dot_dimension_numbers<[1], [0], [0], [1], [0, 0, 1, 1], [], []>} : vector<16x4xbf16>, vector<4x256xbf16>, vector<16x256xf32> -> vector<16x256xf32>
    %c0_4 = arith.constant 0 : index
    %c0_5 = arith.constant 0 : index
    %4 = vector.load %arg3[%c0_4, %c0_5] : memref<16x1xf32, #tpu.memory_space<vmem>>, vector<16x1xf32>
    %5 = vector.broadcast %4 : vector<16x1xf32> to vector<16x256xf32>
    %6 = arith.addf %3, %5 : vector<16x256xf32>
    %cst_6 = arith.constant 0.000000e+00 : f32
    %7 = vector.broadcast %cst_6 : f32 to vector<16x256xf32>
    %8 = arith.maximumf %6, %7 : vector<16x256xf32>
    %9 = vector.extract_strided_slice %8 {offsets = [0, 0], sizes = [8, 256], strides = [1, 1]} : vector<16x256xf32> to vector<8x256xf32>
    %10 = vector.extract_strided_slice %8 {offsets = [8, 0], sizes = [8, 256], strides = [1, 1]} : vector<16x256xf32> to vector<8x256xf32>
    %c0_7 = arith.constant 0 : index
    %c0_8 = arith.constant 0 : index
    %c0_9 = arith.constant 0 : index
    %11 = vector.load %arg6[%c0_7, %c0_8, %c0_9] : memref<9x1x256xf32, #tpu.memory_space<vmem>>, vector<9x1x256xf32>
    %12 = vector.extract_strided_slice %9 {offsets = [0, 239], sizes = [8, 17], strides = [1, 1]} : vector<8x256xf32> to vector<8x17xf32>
    %13 = vector.extract_strided_slice %9 {offsets = [0, 0], sizes = [8, 239], strides = [1, 1]} : vector<8x256xf32> to vector<8x239xf32>
    %14 = tpu.concatenate %12, %13 in 1 : vector<8x17xf32>, vector<8x239xf32> -> vector<8x256xf32>
    %15 = vector.extract_strided_slice %11 {offsets = [0, 0, 0], sizes = [1, 1, 256], strides = [1, 1, 1]} : vector<9x1x256xf32> to vector<1x1x256xf32>
    %16 = vector.shape_cast %15 : vector<1x1x256xf32> to vector<1x256xf32>
    %17 = vector.broadcast %16 : vector<1x256xf32> to vector<8x256xf32>
    %18 = arith.mulf %14, %17 : vector<8x256xf32>
    %19 = vector.extract_strided_slice %9 {offsets = [0, 240], sizes = [8, 16], strides = [1, 1]} : vector<8x256xf32> to vector<8x16xf32>
    %20 = vector.extract_strided_slice %9 {offsets = [0, 0], sizes = [8, 240], strides = [1, 1]} : vector<8x256xf32> to vector<8x240xf32>
    %21 = tpu.concatenate %19, %20 in 1 : vector<8x16xf32>, vector<8x240xf32> -> vector<8x256xf32>
    %22 = vector.extract_strided_slice %11 {offsets = [1, 0, 0], sizes = [1, 1, 256], strides = [1, 1, 1]} : vector<9x1x256xf32> to vector<1x1x256xf32>
    %23 = vector.shape_cast %22 : vector<1x1x256xf32> to vector<1x256xf32>
    %24 = vector.broadcast %23 : vector<1x256xf32> to vector<8x256xf32>
    %25 = arith.mulf %21, %24 : vector<8x256xf32>
    %26 = vector.extract_strided_slice %9 {offsets = [0, 241], sizes = [8, 15], strides = [1, 1]} : vector<8x256xf32> to vector<8x15xf32>
    %27 = vector.extract_strided_slice %9 {offsets = [0, 0], sizes = [8, 241], strides = [1, 1]} : vector<8x256xf32> to vector<8x241xf32>
    %28 = tpu.concatenate %26, %27 in 1 : vector<8x15xf32>, vector<8x241xf32> -> vector<8x256xf32>
    %29 = vector.extract_strided_slice %11 {offsets = [2, 0, 0], sizes = [1, 1, 256], strides = [1, 1, 1]} : vector<9x1x256xf32> to vector<1x1x256xf32>
    %30 = vector.shape_cast %29 : vector<1x1x256xf32> to vector<1x256xf32>
    %31 = vector.broadcast %30 : vector<1x256xf32> to vector<8x256xf32>
    %32 = arith.mulf %28, %31 : vector<8x256xf32>
    %33 = vector.extract_strided_slice %9 {offsets = [0, 255], sizes = [8, 1], strides = [1, 1]} : vector<8x256xf32> to vector<8x1xf32>
    %34 = vector.extract_strided_slice %9 {offsets = [0, 0], sizes = [8, 255], strides = [1, 1]} : vector<8x256xf32> to vector<8x255xf32>
    %35 = tpu.concatenate %33, %34 in 1 : vector<8x1xf32>, vector<8x255xf32> -> vector<8x256xf32>
    %36 = vector.extract_strided_slice %11 {offsets = [3, 0, 0], sizes = [1, 1, 256], strides = [1, 1, 1]} : vector<9x1x256xf32> to vector<1x1x256xf32>
    %37 = vector.shape_cast %36 : vector<1x1x256xf32> to vector<1x256xf32>
    %38 = vector.broadcast %37 : vector<1x256xf32> to vector<8x256xf32>
    %39 = arith.mulf %35, %38 : vector<8x256xf32>
    %40 = vector.extract_strided_slice %9 {offsets = [0, 1], sizes = [8, 255], strides = [1, 1]} : vector<8x256xf32> to vector<8x255xf32>
    %41 = vector.extract_strided_slice %9 {offsets = [0, 0], sizes = [8, 1], strides = [1, 1]} : vector<8x256xf32> to vector<8x1xf32>
    %42 = tpu.concatenate %40, %41 in 1 : vector<8x255xf32>, vector<8x1xf32> -> vector<8x256xf32>
    %43 = vector.extract_strided_slice %11 {offsets = [5, 0, 0], sizes = [1, 1, 256], strides = [1, 1, 1]} : vector<9x1x256xf32> to vector<1x1x256xf32>
    %44 = vector.shape_cast %43 : vector<1x1x256xf32> to vector<1x256xf32>
    %45 = vector.broadcast %44 : vector<1x256xf32> to vector<8x256xf32>
    %46 = arith.mulf %42, %45 : vector<8x256xf32>
    %47 = vector.extract_strided_slice %9 {offsets = [0, 15], sizes = [8, 241], strides = [1, 1]} : vector<8x256xf32> to vector<8x241xf32>
    %48 = vector.extract_strided_slice %9 {offsets = [0, 0], sizes = [8, 15], strides = [1, 1]} : vector<8x256xf32> to vector<8x15xf32>
    %49 = tpu.concatenate %47, %48 in 1 : vector<8x241xf32>, vector<8x15xf32> -> vector<8x256xf32>
    %50 = vector.extract_strided_slice %11 {offsets = [6, 0, 0], sizes = [1, 1, 256], strides = [1, 1, 1]} : vector<9x1x256xf32> to vector<1x1x256xf32>
    %51 = vector.shape_cast %50 : vector<1x1x256xf32> to vector<1x256xf32>
    %52 = vector.broadcast %51 : vector<1x256xf32> to vector<8x256xf32>
    %53 = arith.mulf %49, %52 : vector<8x256xf32>
    %54 = vector.extract_strided_slice %9 {offsets = [0, 16], sizes = [8, 240], strides = [1, 1]} : vector<8x256xf32> to vector<8x240xf32>
    %55 = vector.extract_strided_slice %9 {offsets = [0, 0], sizes = [8, 16], strides = [1, 1]} : vector<8x256xf32> to vector<8x16xf32>
    %56 = tpu.concatenate %54, %55 in 1 : vector<8x240xf32>, vector<8x16xf32> -> vector<8x256xf32>
    %57 = vector.extract_strided_slice %11 {offsets = [7, 0, 0], sizes = [1, 1, 256], strides = [1, 1, 1]} : vector<9x1x256xf32> to vector<1x1x256xf32>
    %58 = vector.shape_cast %57 : vector<1x1x256xf32> to vector<1x256xf32>
    %59 = vector.broadcast %58 : vector<1x256xf32> to vector<8x256xf32>
    %60 = arith.mulf %56, %59 : vector<8x256xf32>
    %61 = vector.extract_strided_slice %9 {offsets = [0, 17], sizes = [8, 239], strides = [1, 1]} : vector<8x256xf32> to vector<8x239xf32>
    %62 = vector.extract_strided_slice %9 {offsets = [0, 0], sizes = [8, 17], strides = [1, 1]} : vector<8x256xf32> to vector<8x17xf32>
    %63 = tpu.concatenate %61, %62 in 1 : vector<8x239xf32>, vector<8x17xf32> -> vector<8x256xf32>
    %64 = vector.extract_strided_slice %11 {offsets = [8, 0, 0], sizes = [1, 1, 256], strides = [1, 1, 1]} : vector<9x1x256xf32> to vector<1x1x256xf32>
    %65 = vector.shape_cast %64 : vector<1x1x256xf32> to vector<1x256xf32>
    %66 = vector.broadcast %65 : vector<1x256xf32> to vector<8x256xf32>
    %67 = arith.mulf %63, %66 : vector<8x256xf32>
    %68 = tpu.concatenate %18, %25, %32, %39, %9, %46, %53, %60, %67 in 0 : vector<8x256xf32>, vector<8x256xf32>, vector<8x256xf32>, vector<8x256xf32>, vector<8x256xf32>, vector<8x256xf32>, vector<8x256xf32>, vector<8x256xf32>, vector<8x256xf32> -> vector<72x256xf32>
    %c0_10 = arith.constant 0 : index
    %c0_11 = arith.constant 0 : index
    %c0_12 = arith.constant 0 : index
    %69 = vector.load %arg4[%c0_10, %c0_11, %c0_12] : memref<3x8x72xbf16, #tpu.memory_space<vmem>>, vector<1x8x72xbf16>
    %70 = vector.shape_cast %69 : vector<1x8x72xbf16> to vector<8x72xbf16>
    %71 = arith.truncf %68 : vector<72x256xf32> to vector<72x256xbf16>
    %cst_13 = arith.constant dense<0.000000e+00> : vector<8x256xf32>
    %72 = tpu.matmul %70, %71, %cst_13 {dimension_numbers = #tpu.dot_dimension_numbers<[1], [0], [0], [1], [0, 0, 1, 1], [], []>} : vector<8x72xbf16>, vector<72x256xbf16>, vector<8x256xf32> -> vector<8x256xf32>
    %c0_14 = arith.constant 0 : index
    %c0_15 = arith.constant 0 : index
    %c0_16 = arith.constant 0 : index
    %73 = vector.load %arg5[%c0_14, %c0_15, %c0_16] : memref<3x8x1xf32, #tpu.memory_space<vmem>>, vector<1x8x1xf32>
    %74 = vector.shape_cast %73 : vector<1x8x1xf32> to vector<8x1xf32>
    %75 = vector.broadcast %74 : vector<8x1xf32> to vector<8x256xf32>
    %76 = arith.addf %72, %75 : vector<8x256xf32>
    %cst_17 = arith.constant 0.000000e+00 : f32
    %77 = vector.broadcast %cst_17 : f32 to vector<8x256xf32>
    %78 = arith.maximumf %76, %77 : vector<8x256xf32>
    %79 = vector.extract_strided_slice %78 {offsets = [0, 239], sizes = [8, 17], strides = [1, 1]} : vector<8x256xf32> to vector<8x17xf32>
    %80 = vector.extract_strided_slice %78 {offsets = [0, 0], sizes = [8, 239], strides = [1, 1]} : vector<8x256xf32> to vector<8x239xf32>
    %81 = tpu.concatenate %79, %80 in 1 : vector<8x17xf32>, vector<8x239xf32> -> vector<8x256xf32>
    %82 = vector.extract_strided_slice %11 {offsets = [0, 0, 0], sizes = [1, 1, 256], strides = [1, 1, 1]} : vector<9x1x256xf32> to vector<1x1x256xf32>
    %83 = vector.shape_cast %82 : vector<1x1x256xf32> to vector<1x256xf32>
    %84 = vector.broadcast %83 : vector<1x256xf32> to vector<8x256xf32>
    %85 = arith.mulf %81, %84 : vector<8x256xf32>
    %86 = vector.extract_strided_slice %78 {offsets = [0, 240], sizes = [8, 16], strides = [1, 1]} : vector<8x256xf32> to vector<8x16xf32>
    %87 = vector.extract_strided_slice %78 {offsets = [0, 0], sizes = [8, 240], strides = [1, 1]} : vector<8x256xf32> to vector<8x240xf32>
    %88 = tpu.concatenate %86, %87 in 1 : vector<8x16xf32>, vector<8x240xf32> -> vector<8x256xf32>
    %89 = vector.extract_strided_slice %11 {offsets = [1, 0, 0], sizes = [1, 1, 256], strides = [1, 1, 1]} : vector<9x1x256xf32> to vector<1x1x256xf32>
    %90 = vector.shape_cast %89 : vector<1x1x256xf32> to vector<1x256xf32>
    %91 = vector.broadcast %90 : vector<1x256xf32> to vector<8x256xf32>
    %92 = arith.mulf %88, %91 : vector<8x256xf32>
    %93 = vector.extract_strided_slice %78 {offsets = [0, 241], sizes = [8, 15], strides = [1, 1]} : vector<8x256xf32> to vector<8x15xf32>
    %94 = vector.extract_strided_slice %78 {offsets = [0, 0], sizes = [8, 241], strides = [1, 1]} : vector<8x256xf32> to vector<8x241xf32>
    %95 = tpu.concatenate %93, %94 in 1 : vector<8x15xf32>, vector<8x241xf32> -> vector<8x256xf32>
    %96 = vector.extract_strided_slice %11 {offsets = [2, 0, 0], sizes = [1, 1, 256], strides = [1, 1, 1]} : vector<9x1x256xf32> to vector<1x1x256xf32>
    %97 = vector.shape_cast %96 : vector<1x1x256xf32> to vector<1x256xf32>
    %98 = vector.broadcast %97 : vector<1x256xf32> to vector<8x256xf32>
    %99 = arith.mulf %95, %98 : vector<8x256xf32>
    %100 = vector.extract_strided_slice %78 {offsets = [0, 255], sizes = [8, 1], strides = [1, 1]} : vector<8x256xf32> to vector<8x1xf32>
    %101 = vector.extract_strided_slice %78 {offsets = [0, 0], sizes = [8, 255], strides = [1, 1]} : vector<8x256xf32> to vector<8x255xf32>
    %102 = tpu.concatenate %100, %101 in 1 : vector<8x1xf32>, vector<8x255xf32> -> vector<8x256xf32>
    %103 = vector.extract_strided_slice %11 {offsets = [3, 0, 0], sizes = [1, 1, 256], strides = [1, 1, 1]} : vector<9x1x256xf32> to vector<1x1x256xf32>
    %104 = vector.shape_cast %103 : vector<1x1x256xf32> to vector<1x256xf32>
    %105 = vector.broadcast %104 : vector<1x256xf32> to vector<8x256xf32>
    %106 = arith.mulf %102, %105 : vector<8x256xf32>
    %107 = vector.extract_strided_slice %78 {offsets = [0, 1], sizes = [8, 255], strides = [1, 1]} : vector<8x256xf32> to vector<8x255xf32>
    %108 = vector.extract_strided_slice %78 {offsets = [0, 0], sizes = [8, 1], strides = [1, 1]} : vector<8x256xf32> to vector<8x1xf32>
    %109 = tpu.concatenate %107, %108 in 1 : vector<8x255xf32>, vector<8x1xf32> -> vector<8x256xf32>
    %110 = vector.extract_strided_slice %11 {offsets = [5, 0, 0], sizes = [1, 1, 256], strides = [1, 1, 1]} : vector<9x1x256xf32> to vector<1x1x256xf32>
    %111 = vector.shape_cast %110 : vector<1x1x256xf32> to vector<1x256xf32>
    %112 = vector.broadcast %111 : vector<1x256xf32> to vector<8x256xf32>
    %113 = arith.mulf %109, %112 : vector<8x256xf32>
    %114 = vector.extract_strided_slice %78 {offsets = [0, 15], sizes = [8, 241], strides = [1, 1]} : vector<8x256xf32> to vector<8x241xf32>
    %115 = vector.extract_strided_slice %78 {offsets = [0, 0], sizes = [8, 15], strides = [1, 1]} : vector<8x256xf32> to vector<8x15xf32>
    %116 = tpu.concatenate %114, %115 in 1 : vector<8x241xf32>, vector<8x15xf32> -> vector<8x256xf32>
    %117 = vector.extract_strided_slice %11 {offsets = [6, 0, 0], sizes = [1, 1, 256], strides = [1, 1, 1]} : vector<9x1x256xf32> to vector<1x1x256xf32>
    %118 = vector.shape_cast %117 : vector<1x1x256xf32> to vector<1x256xf32>
    %119 = vector.broadcast %118 : vector<1x256xf32> to vector<8x256xf32>
    %120 = arith.mulf %116, %119 : vector<8x256xf32>
    %121 = vector.extract_strided_slice %78 {offsets = [0, 16], sizes = [8, 240], strides = [1, 1]} : vector<8x256xf32> to vector<8x240xf32>
    %122 = vector.extract_strided_slice %78 {offsets = [0, 0], sizes = [8, 16], strides = [1, 1]} : vector<8x256xf32> to vector<8x16xf32>
    %123 = tpu.concatenate %121, %122 in 1 : vector<8x240xf32>, vector<8x16xf32> -> vector<8x256xf32>
    %124 = vector.extract_strided_slice %11 {offsets = [7, 0, 0], sizes = [1, 1, 256], strides = [1, 1, 1]} : vector<9x1x256xf32> to vector<1x1x256xf32>
    %125 = vector.shape_cast %124 : vector<1x1x256xf32> to vector<1x256xf32>
    %126 = vector.broadcast %125 : vector<1x256xf32> to vector<8x256xf32>
    %127 = arith.mulf %123, %126 : vector<8x256xf32>
    %128 = vector.extract_strided_slice %78 {offsets = [0, 17], sizes = [8, 239], strides = [1, 1]} : vector<8x256xf32> to vector<8x239xf32>
    %129 = vector.extract_strided_slice %78 {offsets = [0, 0], sizes = [8, 17], strides = [1, 1]} : vector<8x256xf32> to vector<8x17xf32>
    %130 = tpu.concatenate %128, %129 in 1 : vector<8x239xf32>, vector<8x17xf32> -> vector<8x256xf32>
    %131 = vector.extract_strided_slice %11 {offsets = [8, 0, 0], sizes = [1, 1, 256], strides = [1, 1, 1]} : vector<9x1x256xf32> to vector<1x1x256xf32>
    %132 = vector.shape_cast %131 : vector<1x1x256xf32> to vector<1x256xf32>
    %133 = vector.broadcast %132 : vector<1x256xf32> to vector<8x256xf32>
    %134 = arith.mulf %130, %133 : vector<8x256xf32>
    %135 = tpu.concatenate %85, %92, %99, %106, %78, %113, %120, %127, %134 in 0 : vector<8x256xf32>, vector<8x256xf32>, vector<8x256xf32>, vector<8x256xf32>, vector<8x256xf32>, vector<8x256xf32>, vector<8x256xf32>, vector<8x256xf32>, vector<8x256xf32> -> vector<72x256xf32>
    %c1 = arith.constant 1 : index
    %c0_18 = arith.constant 0 : index
    %c0_19 = arith.constant 0 : index
    %136 = vector.load %arg4[%c1, %c0_18, %c0_19] : memref<3x8x72xbf16, #tpu.memory_space<vmem>>, vector<1x8x72xbf16>
    %137 = vector.shape_cast %136 : vector<1x8x72xbf16> to vector<8x72xbf16>
    %138 = arith.truncf %135 : vector<72x256xf32> to vector<72x256xbf16>
    %cst_20 = arith.constant dense<0.000000e+00> : vector<8x256xf32>
    %139 = tpu.matmul %137, %138, %cst_20 {dimension_numbers = #tpu.dot_dimension_numbers<[1], [0], [0], [1], [0, 0, 1, 1], [], []>} : vector<8x72xbf16>, vector<72x256xbf16>, vector<8x256xf32> -> vector<8x256xf32>
    %c1_21 = arith.constant 1 : index
    %c0_22 = arith.constant 0 : index
    %c0_23 = arith.constant 0 : index
    %140 = vector.load %arg5[%c1_21, %c0_22, %c0_23] : memref<3x8x1xf32, #tpu.memory_space<vmem>>, vector<1x8x1xf32>
    %141 = vector.shape_cast %140 : vector<1x8x1xf32> to vector<8x1xf32>
    %142 = vector.broadcast %141 : vector<8x1xf32> to vector<8x256xf32>
    %143 = arith.addf %139, %142 : vector<8x256xf32>
    %cst_24 = arith.constant 0.000000e+00 : f32
    %144 = vector.broadcast %cst_24 : f32 to vector<8x256xf32>
    %145 = arith.maximumf %143, %144 : vector<8x256xf32>
    %146 = vector.extract_strided_slice %145 {offsets = [0, 239], sizes = [8, 17], strides = [1, 1]} : vector<8x256xf32> to vector<8x17xf32>
    %147 = vector.extract_strided_slice %145 {offsets = [0, 0], sizes = [8, 239], strides = [1, 1]} : vector<8x256xf32> to vector<8x239xf32>
    %148 = tpu.concatenate %146, %147 in 1 : vector<8x17xf32>, vector<8x239xf32> -> vector<8x256xf32>
    %149 = vector.extract_strided_slice %11 {offsets = [0, 0, 0], sizes = [1, 1, 256], strides = [1, 1, 1]} : vector<9x1x256xf32> to vector<1x1x256xf32>
    %150 = vector.shape_cast %149 : vector<1x1x256xf32> to vector<1x256xf32>
    %151 = vector.broadcast %150 : vector<1x256xf32> to vector<8x256xf32>
    %152 = arith.mulf %148, %151 : vector<8x256xf32>
    %153 = vector.extract_strided_slice %145 {offsets = [0, 240], sizes = [8, 16], strides = [1, 1]} : vector<8x256xf32> to vector<8x16xf32>
    %154 = vector.extract_strided_slice %145 {offsets = [0, 0], sizes = [8, 240], strides = [1, 1]} : vector<8x256xf32> to vector<8x240xf32>
    %155 = tpu.concatenate %153, %154 in 1 : vector<8x16xf32>, vector<8x240xf32> -> vector<8x256xf32>
    %156 = vector.extract_strided_slice %11 {offsets = [1, 0, 0], sizes = [1, 1, 256], strides = [1, 1, 1]} : vector<9x1x256xf32> to vector<1x1x256xf32>
    %157 = vector.shape_cast %156 : vector<1x1x256xf32> to vector<1x256xf32>
    %158 = vector.broadcast %157 : vector<1x256xf32> to vector<8x256xf32>
    %159 = arith.mulf %155, %158 : vector<8x256xf32>
    %160 = vector.extract_strided_slice %145 {offsets = [0, 241], sizes = [8, 15], strides = [1, 1]} : vector<8x256xf32> to vector<8x15xf32>
    %161 = vector.extract_strided_slice %145 {offsets = [0, 0], sizes = [8, 241], strides = [1, 1]} : vector<8x256xf32> to vector<8x241xf32>
    %162 = tpu.concatenate %160, %161 in 1 : vector<8x15xf32>, vector<8x241xf32> -> vector<8x256xf32>
    %163 = vector.extract_strided_slice %11 {offsets = [2, 0, 0], sizes = [1, 1, 256], strides = [1, 1, 1]} : vector<9x1x256xf32> to vector<1x1x256xf32>
    %164 = vector.shape_cast %163 : vector<1x1x256xf32> to vector<1x256xf32>
    %165 = vector.broadcast %164 : vector<1x256xf32> to vector<8x256xf32>
    %166 = arith.mulf %162, %165 : vector<8x256xf32>
    %167 = vector.extract_strided_slice %145 {offsets = [0, 255], sizes = [8, 1], strides = [1, 1]} : vector<8x256xf32> to vector<8x1xf32>
    %168 = vector.extract_strided_slice %145 {offsets = [0, 0], sizes = [8, 255], strides = [1, 1]} : vector<8x256xf32> to vector<8x255xf32>
    %169 = tpu.concatenate %167, %168 in 1 : vector<8x1xf32>, vector<8x255xf32> -> vector<8x256xf32>
    %170 = vector.extract_strided_slice %11 {offsets = [3, 0, 0], sizes = [1, 1, 256], strides = [1, 1, 1]} : vector<9x1x256xf32> to vector<1x1x256xf32>
    %171 = vector.shape_cast %170 : vector<1x1x256xf32> to vector<1x256xf32>
    %172 = vector.broadcast %171 : vector<1x256xf32> to vector<8x256xf32>
    %173 = arith.mulf %169, %172 : vector<8x256xf32>
    %174 = vector.extract_strided_slice %145 {offsets = [0, 1], sizes = [8, 255], strides = [1, 1]} : vector<8x256xf32> to vector<8x255xf32>
    %175 = vector.extract_strided_slice %145 {offsets = [0, 0], sizes = [8, 1], strides = [1, 1]} : vector<8x256xf32> to vector<8x1xf32>
    %176 = tpu.concatenate %174, %175 in 1 : vector<8x255xf32>, vector<8x1xf32> -> vector<8x256xf32>
    %177 = vector.extract_strided_slice %11 {offsets = [5, 0, 0], sizes = [1, 1, 256], strides = [1, 1, 1]} : vector<9x1x256xf32> to vector<1x1x256xf32>
    %178 = vector.shape_cast %177 : vector<1x1x256xf32> to vector<1x256xf32>
    %179 = vector.broadcast %178 : vector<1x256xf32> to vector<8x256xf32>
    %180 = arith.mulf %176, %179 : vector<8x256xf32>
    %181 = vector.extract_strided_slice %145 {offsets = [0, 15], sizes = [8, 241], strides = [1, 1]} : vector<8x256xf32> to vector<8x241xf32>
    %182 = vector.extract_strided_slice %145 {offsets = [0, 0], sizes = [8, 15], strides = [1, 1]} : vector<8x256xf32> to vector<8x15xf32>
    %183 = tpu.concatenate %181, %182 in 1 : vector<8x241xf32>, vector<8x15xf32> -> vector<8x256xf32>
    %184 = vector.extract_strided_slice %11 {offsets = [6, 0, 0], sizes = [1, 1, 256], strides = [1, 1, 1]} : vector<9x1x256xf32> to vector<1x1x256xf32>
    %185 = vector.shape_cast %184 : vector<1x1x256xf32> to vector<1x256xf32>
    %186 = vector.broadcast %185 : vector<1x256xf32> to vector<8x256xf32>
    %187 = arith.mulf %183, %186 : vector<8x256xf32>
    %188 = vector.extract_strided_slice %145 {offsets = [0, 16], sizes = [8, 240], strides = [1, 1]} : vector<8x256xf32> to vector<8x240xf32>
    %189 = vector.extract_strided_slice %145 {offsets = [0, 0], sizes = [8, 16], strides = [1, 1]} : vector<8x256xf32> to vector<8x16xf32>
    %190 = tpu.concatenate %188, %189 in 1 : vector<8x240xf32>, vector<8x16xf32> -> vector<8x256xf32>
    %191 = vector.extract_strided_slice %11 {offsets = [7, 0, 0], sizes = [1, 1, 256], strides = [1, 1, 1]} : vector<9x1x256xf32> to vector<1x1x256xf32>
    %192 = vector.shape_cast %191 : vector<1x1x256xf32> to vector<1x256xf32>
    %193 = vector.broadcast %192 : vector<1x256xf32> to vector<8x256xf32>
    %194 = arith.mulf %190, %193 : vector<8x256xf32>
    %195 = vector.extract_strided_slice %145 {offsets = [0, 17], sizes = [8, 239], strides = [1, 1]} : vector<8x256xf32> to vector<8x239xf32>
    %196 = vector.extract_strided_slice %145 {offsets = [0, 0], sizes = [8, 17], strides = [1, 1]} : vector<8x256xf32> to vector<8x17xf32>
    %197 = tpu.concatenate %195, %196 in 1 : vector<8x239xf32>, vector<8x17xf32> -> vector<8x256xf32>
    %198 = vector.extract_strided_slice %11 {offsets = [8, 0, 0], sizes = [1, 1, 256], strides = [1, 1, 1]} : vector<9x1x256xf32> to vector<1x1x256xf32>
    %199 = vector.shape_cast %198 : vector<1x1x256xf32> to vector<1x256xf32>
    %200 = vector.broadcast %199 : vector<1x256xf32> to vector<8x256xf32>
    %201 = arith.mulf %197, %200 : vector<8x256xf32>
    %202 = tpu.concatenate %152, %159, %166, %173, %145, %180, %187, %194, %201 in 0 : vector<8x256xf32>, vector<8x256xf32>, vector<8x256xf32>, vector<8x256xf32>, vector<8x256xf32>, vector<8x256xf32>, vector<8x256xf32>, vector<8x256xf32>, vector<8x256xf32> -> vector<72x256xf32>
    %c2 = arith.constant 2 : index
    %c0_25 = arith.constant 0 : index
    %c0_26 = arith.constant 0 : index
    %203 = vector.load %arg4[%c2, %c0_25, %c0_26] : memref<3x8x72xbf16, #tpu.memory_space<vmem>>, vector<1x8x72xbf16>
    %204 = vector.shape_cast %203 : vector<1x8x72xbf16> to vector<8x72xbf16>
    %205 = arith.truncf %202 : vector<72x256xf32> to vector<72x256xbf16>
    %cst_27 = arith.constant dense<0.000000e+00> : vector<8x256xf32>
    %206 = tpu.matmul %204, %205, %cst_27 {dimension_numbers = #tpu.dot_dimension_numbers<[1], [0], [0], [1], [0, 0, 1, 1], [], []>} : vector<8x72xbf16>, vector<72x256xbf16>, vector<8x256xf32> -> vector<8x256xf32>
    %c2_28 = arith.constant 2 : index
    %c0_29 = arith.constant 0 : index
    %c0_30 = arith.constant 0 : index
    %207 = vector.load %arg5[%c2_28, %c0_29, %c0_30] : memref<3x8x1xf32, #tpu.memory_space<vmem>>, vector<1x8x1xf32>
    %208 = vector.shape_cast %207 : vector<1x8x1xf32> to vector<8x1xf32>
    %209 = vector.broadcast %208 : vector<8x1xf32> to vector<8x256xf32>
    %210 = arith.addf %206, %209 : vector<8x256xf32>
    %cst_31 = arith.constant 0.000000e+00 : f32
    %211 = vector.broadcast %cst_31 : f32 to vector<8x256xf32>
    %212 = arith.maximumf %210, %211 : vector<8x256xf32>
    %213 = arith.addf %212, %10 : vector<8x256xf32>
    %c0_32 = arith.constant 0 : index
    %c0_33 = arith.constant 0 : index
    %c0_34 = arith.constant 0 : index
    %214 = vector.load %arg7[%c0_32, %c0_33, %c0_34] : memref<1x8x256xf32, #tpu.memory_space<vmem>>, vector<1x8x256xf32>
    %215 = vector.shape_cast %214 : vector<1x8x256xf32> to vector<8x256xf32>
    %216 = vector.shape_cast %213 : vector<8x256xf32> to vector<1x8x256xf32>
    tpu.vector_store %arg7[%c0_32, %c0_33, %c0_34], %216 {strides = array<i32>} : memref<1x8x256xf32, #tpu.memory_space<vmem>>, vector<1x8x256xf32>,
    return
  }
  func.func @transform_0(%arg0: i32) -> (i32, i32, i32) {
    %c0_i32 = arith.constant 0 : i32
    %c0_i32_0 = arith.constant 0 : i32
    %c0_i32_1 = arith.constant 0 : i32
    return %arg0, %c0_i32, %c0_i32_0 : i32, i32, i32
  }
  func.func @transform_1(%arg0: i32) -> (i32, i32) {
    %c0_i32 = arith.constant 0 : i32
    %c0_i32_0 = arith.constant 0 : i32
    %c0_i32_1 = arith.constant 0 : i32
    return %c0_i32, %c0_i32_0 : i32, i32
  }
  func.func @transform_2(%arg0: i32) -> (i32, i32) {
    %c0_i32 = arith.constant 0 : i32
    %c0_i32_0 = arith.constant 0 : i32
    %c0_i32_1 = arith.constant 0 : i32
    return %c0_i32, %c0_i32_0 : i32, i32
  }
  func.func @transform_3(%arg0: i32) -> (i32, i32, i32) {
    %c0_i32 = arith.constant 0 : i32
    %c0_i32_0 = arith.constant 0 : i32
    %c0_i32_1 = arith.constant 0 : i32
    %c0_i32_2 = arith.constant 0 : i32
    return %c0_i32, %c0_i32_0, %c0_i32_1 : i32, i32, i32
  }
  func.func @transform_4(%arg0: i32) -> (i32, i32, i32) {
    %c0_i32 = arith.constant 0 : i32
    %c0_i32_0 = arith.constant 0 : i32
    %c0_i32_1 = arith.constant 0 : i32
    %c0_i32_2 = arith.constant 0 : i32
    return %c0_i32, %c0_i32_0, %c0_i32_1 : i32, i32, i32
  }
  func.func @transform_5(%arg0: i32) -> (i32, i32, i32) {
    %c0_i32 = arith.constant 0 : i32
    %c0_i32_0 = arith.constant 0 : i32
    %c0_i32_1 = arith.constant 0 : i32
    %c0_i32_2 = arith.constant 0 : i32
    return %c0_i32, %c0_i32_0, %c0_i32_1 : i32, i32, i32
  }
  func.func @transform_6(%arg0: i32) -> (i32, i32, i32) {
    %c0_i32 = arith.constant 0 : i32
    %c0_i32_0 = arith.constant 0 : i32
    %c0_i32_1 = arith.constant 0 : i32
    return %arg0, %c0_i32, %c0_i32_0 : i32, i32, i32
  }
}

</mosaic_0001>

<llo_original>
// kernel: tpu_custom_call.1
$region0: #{tpu_custom_call.1}
  #allocation0 [shape = 'u32[]', space=smem, size = 0x4, offset = 0x4, fixed_abs, tag = 'smem constant byte address 0x4 - core index']
  #allocation1 [shape = 'u32[144,128]{1,0:T(1,128)}', space=vmem, size = 0x12000, scoped, tag = 'internal scratch']
  %s0 = inlined_call_operand.vmem [shape: bf16[2,4,256], index: 0, kind: input, shape index: {}]
  %s1 = inlined_call_operand.vmem [shape: bf16[16,4], index: 1, kind: input, shape index: {}]
  %s2 = inlined_call_operand.vmem [shape: f32[16,1], index: 2, kind: input, shape index: {}]
  %s3 = inlined_call_operand.vmem [shape: bf16[3,8,72], index: 3, kind: input, shape index: {}]
  %s4 = inlined_call_operand.vmem [shape: f32[3,8,1], index: 4, kind: input, shape index: {}]
  %s5 = inlined_call_operand.vmem [shape: f32[9,1,256], index: 5, kind: input, shape index: {}]
  %s6 = inlined_call_operand.hbm [shape: f32[2,8,256], index: 6, kind: output, shape index: {}]
  %s7 = sld [smem:[#allocation0]]
  $region57: #{tpu_custom_call.1} parent=0
    _
  %s9 = ssub.s32 1, %s7
  %s10 = scalar_select 0, %s9, %s7
  $region1: #{tpu_custom_call.1} parent=0
    #allocation2 [shape = 'u8[16384]{0}', space=vmem, size = 0x4000, scoped, tag = 'output window, operand 0']
    #allocation3 [shape = 's32[2]{0}', space=sflag, size = 0x8, scoped, tag = 'scoped memory for tpu_custom_call.1']
    %11 = vsyncpa [#allocation3], 0
    %s12 = scalar_lea.sflag [#allocation3], 1
    %13 = vsyncpa %s12, 0
    loop: start=0, step=1, limit=4
    $region2: #{tpu_custom_call.1} parent=1 // loop_pre_header
      _
    $region3: #{tpu_custom_call.1} parent=1 // loop_header
      %s15 = sphi 0, %s19
      %p16 = scmp.ge.s32.totalorder %s15, 4
      %s25 = sphi 0, %s27
      %s28 = sphi 0, %s25
      %s29 = sphi 0, %s28
      %s45 = sphi 0, %s29
      %s49 = sphi 0, %s49
      %s51 = sphi 0, %s49
      %s52 = sphi 0, %s51
      %s66 = sphi 0, %s52
      %s70 = sphi 0, %s70
      %s72 = sphi 0, %s70
      %s73 = sphi 0, %s72
      %s87 = sphi 0, %s73
      %s91 = sphi 0, %s91
      %s93 = sphi 0, %s91
      %s94 = sphi 0, %s93
      %s108 = sphi 0, %s94
      %s112 = sphi 0, %s112
      %s114 = sphi 0, %s112
      %s115 = sphi 0, %s114
      %s129 = sphi 0, %s115
      %s133 = sphi 0, %s133
      %s135 = sphi 0, %s133
      %s136 = sphi 0, %s135
      %s150 = sphi 0, %s136
      %s156 = sphi 0, %s158
      %s159 = sphi 0, %s156
      %s160 = sphi 0, %s159
      %s176 = sphi 0, %s160
    $region4: #{tpu_custom_call.1} parent=1 // loop_header_branch
      %18 = sbr.rel (%p16) target = $region8
    $region5: #{tpu_custom_call.1} parent=1 // loop_body
      %s20 = ssub.s32 %s15, 1
      %s21 = ssub.s32 %s15, 2
      %s22 = sadd.s32 %s15, 1
      %s23 = ssub.s32 %s15, %s22
      %p24 = scmp.eq.s32.totalorder %s23, 0
      %s26 = sadd.s32 %s25, 1
      %s27 = scalar_select %p24, %s25, %s26
      %p30 = pneg %p24
      %p31 = scmp.eq.s32.totalorder %s15, 1
      %p32 = por %p30, %p31
      %p33 = scmp.ne.s32.totalorder %s25, %s28
      %p34 = scmp.eq.s32.totalorder %s15, 0
      %p35 = por %p33, %p34
      %p36 = scmp.ne.s32.totalorder %s25, %s28
      %p37 = scmp.eq.s32.totalorder %s20, 1
      %p38 = por %p36, %p37
      %p39 = scmp.ne.s32.totalorder %s28, %s29
      %p40 = scmp.eq.s32.totalorder %s20, 0
      %p41 = por %p39, %p40
      %p42 = scmp.ne.s32.totalorder %s28, %s29
      %p43 = scmp.eq.s32.totalorder %s21, 1
      %p44 = por %p42, %p43
      %p46 = scmp.ne.s32.totalorder %s29, %s45
      %p47 = scmp.eq.s32.totalorder %s21, 0
      %p48 = por %p46, %p47
      %s50 = sadd.s32 %s49, 1
      %p53 = scmp.eq.s32.totalorder %s15, 1
      %p54 = scmp.ne.s32.totalorder %s49, %s51
      %p55 = scmp.eq.s32.totalorder %s15, 0
      %p56 = por %p54, %p55
      %p57 = scmp.ne.s32.totalorder %s49, %s51
      %p58 = scmp.eq.s32.totalorder %s20, 1
      %p59 = por %p57, %p58
      %p60 = scmp.ne.s32.totalorder %s51, %s52
      %p61 = scmp.eq.s32.totalorder %s20, 0
      %p62 = por %p60, %p61
      %p63 = scmp.ne.s32.totalorder %s51, %s52
      %p64 = scmp.eq.s32.totalorder %s21, 1
      %p65 = por %p63, %p64
      %p67 = scmp.ne.s32.totalorder %s52, %s66
      %p68 = scmp.eq.s32.totalorder %s21, 0
      %p69 = por %p67, %p68
      %s71 = sadd.s32 %s70, 1
      %p74 = scmp.eq.s32.totalorder %s15, 1
      %p75 = scmp.ne.s32.totalorder %s70, %s72
      %p76 = scmp.eq.s32.totalorder %s15, 0
      %p77 = por %p75, %p76
      %p78 = scmp.ne.s32.totalorder %s70, %s72
      %p79 = scmp.eq.s32.totalorder %s20, 1
      %p80 = por %p78, %p79
      %p81 = scmp.ne.s32.totalorder %s72, %s73
      %p82 = scmp.eq.s32.totalorder %s20, 0
      %p83 = por %p81, %p82
      %p84 = scmp.ne.s32.totalorder %s72, %s73
      %p85 = scmp.eq.s32.totalorder %s21, 1
      %p86 = por %p84, %p85
      %p88 = scmp.ne.s32.totalorder %s73, %s87
      %p89 = scmp.eq.s32.totalorder %s21, 0
      %p90 = por %p88, %p89
      %s92 = sadd.s32 %s91, 1
      %p95 = scmp.eq.s32.totalorder %s15, 1
      %p96 = scmp.ne.s32.totalorder %s91, %s93
      %p97 = scmp.eq.s32.totalorder %s15, 0
      %p98 = por %p96, %p97
      %p99 = scmp.ne.s32.totalorder %s91, %s93
      %p100 = scmp.eq.s32.totalorder %s20, 1
      %p101 = por %p99, %p100
      %p102 = scmp.ne.s32.totalorder %s93, %s94
      %p103 = scmp.eq.s32.totalorder %s20, 0
      %p104 = por %p102, %p103
      %p105 = scmp.ne.s32.totalorder %s93, %s94
      %p106 = scmp.eq.s32.totalorder %s21, 1
      %p107 = por %p105, %p106
      %p109 = scmp.ne.s32.totalorder %s94, %s108
      %p110 = scmp.eq.s32.totalorder %s21, 0
      %p111 = por %p109, %p110
      %s113 = sadd.s32 %s112, 1
      %p116 = scmp.eq.s32.totalorder %s15, 1
      %p117 = scmp.ne.s32.totalorder %s112, %s114
      %p118 = scmp.eq.s32.totalorder %s15, 0
      %p119 = por %p117, %p118
      %p120 = scmp.ne.s32.totalorder %s112, %s114
      %p121 = scmp.eq.s32.totalorder %s20, 1
      %p122 = por %p120, %p121
      %p123 = scmp.ne.s32.totalorder %s114, %s115
      %p124 = scmp.eq.s32.totalorder %s20, 0
      %p125 = por %p123, %p124
      %p126 = scmp.ne.s32.totalorder %s114, %s115
      %p127 = scmp.eq.s32.totalorder %s21, 1
      %p128 = por %p126, %p127
      %p130 = scmp.ne.s32.totalorder %s115, %s129
      %p131 = scmp.eq.s32.totalorder %s21, 0
      %p132 = por %p130, %p131
      %s134 = sadd.s32 %s133, 1
      %p137 = scmp.eq.s32.totalorder %s15, 1
      %p138 = scmp.ne.s32.totalorder %s133, %s135
      %p139 = scmp.eq.s32.totalorder %s15, 0
      %p140 = por %p138, %p139
      %p141 = scmp.ne.s32.totalorder %s133, %s135
      %p142 = scmp.eq.s32.totalorder %s20, 1
      %p143 = por %p141, %p142
      %p144 = scmp.ne.s32.totalorder %s135, %s136
      %p145 = scmp.eq.s32.totalorder %s20, 0
      %p146 = por %p144, %p145
      %p147 = scmp.ne.s32.totalorder %s135, %s136
      %p148 = scmp.eq.s32.totalorder %s21, 1
      %p149 = por %p147, %p148
      %p151 = scmp.ne.s32.totalorder %s136, %s150
      %p152 = scmp.eq.s32.totalorder %s21, 0
      %p153 = por %p151, %p152
      %s154 = ssub.s32 %s15, %s22
      %p155 = scmp.eq.s32.totalorder %s154, 0
      %s157 = sadd.s32 %s156, 1
      %s158 = scalar_select %p155, %s156, %s157
      %p161 = pneg %p155
      %p162 = scmp.eq.s32.totalorder %s15, 1
      %p163 = por %p161, %p162
      %p164 = scmp.ne.s32.totalorder %s156, %s159
      %p165 = scmp.eq.s32.totalorder %s15, 0
      %p166 = por %p164, %p165
      %p167 = scmp.ne.s32.totalorder %s156, %s159
      %p168 = scmp.eq.s32.totalorder %s20, 1
      %p169 = por %p167, %p168
      %p170 = scmp.ne.s32.totalorder %s159, %s160
      %p171 = scmp.eq.s32.totalorder %s20, 0
      %p172 = por %p170, %p171
      %p173 = scmp.ne.s32.totalorder %s159, %s160
      %p174 = scmp.eq.s32.totalorder %s21, 1
      %p175 = por %p173, %p174
      %p177 = scmp.ne.s32.totalorder %s160, %s176
      %p178 = scmp.eq.s32.totalorder %s21, 0
      %p179 = por %p177, %p178
      %p180 = scmp.le.s32.totalorder 1, %s15
      %p181 = scmp.lt.s32.totalorder %s15, 3
      %p182 = pnand %p180, %p181
      %p183 = pneg %p182
      // Predicated region
      $region9: #{tpu_custom_call.1} parent=5 // pred_check
        _
      $region10: #{tpu_custom_call.1} parent=5 // pred_check_branch
        %185 = sbr.rel (%p182) target = $region12
      $region11: #{tpu_custom_call.1} parent=5 // pred_region
        %s186 = ssub.s32 %s15, 1
        // Predicated region
        $region13: #{tpu_custom_call.1} parent=11 // pred_check
          %p187 = pneg %p62
        $region14: #{tpu_custom_call.1} parent=11 // pred_check_branch
          %189 = sbr.rel (%p187) target = $region16
        $region15: #{tpu_custom_call.1} parent=11 // pred_region
          _
        $region16: #{tpu_custom_call.1} parent=11 // pred_fallthru
          _
        // Predicated region
        $region17: #{tpu_custom_call.1} parent=11 // pred_check
          %p190 = pneg %p83
        $region18: #{tpu_custom_call.1} parent=11 // pred_check_branch
          %192 = sbr.rel (%p190) target = $region20
        $region19: #{tpu_custom_call.1} parent=11 // pred_region
          _
        $region20: #{tpu_custom_call.1} parent=11 // pred_fallthru
          _
        // Predicated region
        $region21: #{tpu_custom_call.1} parent=11 // pred_check
          %p193 = pneg %p104
        $region22: #{tpu_custom_call.1} parent=11 // pred_check_branch
          %195 = sbr.rel (%p193) target = $region24
        $region23: #{tpu_custom_call.1} parent=11 // pred_region
          _
        $region24: #{tpu_custom_call.1} parent=11 // pred_fallthru
          _
        // Predicated region
        $region25: #{tpu_custom_call.1} parent=11 // pred_check
          %p196 = pneg %p125
        $region26: #{tpu_custom_call.1} parent=11 // pred_check_branch
          %198 = sbr.rel (%p196) target = $region28
        $region27: #{tpu_custom_call.1} parent=11 // pred_region
          _
        $region28: #{tpu_custom_call.1} parent=11 // pred_fallthru
          _
        // Predicated region
        $region29: #{tpu_custom_call.1} parent=11 // pred_check
          %p199 = pneg %p146
        $region30: #{tpu_custom_call.1} parent=11 // pred_check_branch
          %201 = sbr.rel (%p199) target = $region32
        $region31: #{tpu_custom_call.1} parent=11 // pred_region
          _
        $region32: #{tpu_custom_call.1} parent=11 // pred_fallthru
          _
      $region12: #{tpu_custom_call.1} parent=5 // pred_fallthru
        _
      %p202 = scmp.lt.s32.totalorder %s15, 2
      // Predicated region
      $region33: #{tpu_custom_call.1} parent=5 // pred_check
        %p203 = pneg %p202
      $region34: #{tpu_custom_call.1} parent=5 // pred_check_branch
        %205 = sbr.rel (%p203) target = $region36
      $region35: #{tpu_custom_call.1} parent=5 // pred_region
        // Predicated region
        $region37: #{tpu_custom_call.1} parent=35 // pred_check
          %p206 = pneg %p35
        $region38: #{tpu_custom_call.1} parent=35 // pred_check_branch
          %208 = sbr.rel (%p206) target = $region40
        $region39: #{tpu_custom_call.1} parent=35 // pred_region
          %p209 = scmp.lt.s32.totalorder %s15, 1
          %s210 = scalar_select %p209, %s15, 1
          %s211 = smul.addr %s210, 2
          %s212 = smul.addr %s211, 2
          %s213 = scalar_lea.vmem %s0, %s212
        $region40: #{tpu_custom_call.1} parent=35 // pred_fallthru
          _
      $region36: #{tpu_custom_call.1} parent=5 // pred_fallthru
        _
      %p214 = scmp.le.s32.totalorder 1, %s15
      %p215 = scmp.lt.s32.totalorder %s15, 3
      %p216 = pnand %p214, %p215
      %p217 = pneg %p216
      // Predicated region
      $region41: #{tpu_custom_call.1} parent=5 // pred_check
        _
      $region42: #{tpu_custom_call.1} parent=5 // pred_check_branch
        %219 = sbr.rel (%p216) target = $region44
      $region43: #{tpu_custom_call.1} parent=5 // pred_region
        %s220 = ssub.s32 %s15, 1
        %p221 = scmp.lt.s32.totalorder %s20, 1
        %s222 = scalar_select %p221, %s20, 1
        %s223 = smul.addr %s222, 2
        %s224 = smul.addr %s223, 2
        %s225 = scalar_lea.vmem %s0, %s224
        %p226 = pneg %p41
        %p227 = pneg %p38
        %p228 = pneg %p62
        %p229 = pneg %p59
        %p230 = pneg %p83
        %p231 = pneg %p80
        %p232 = pneg %p104
        %p233 = pneg %p101
        %p234 = pneg %p125
        %p235 = pneg %p122
        %p236 = pneg %p146
        %p237 = pneg %p143
        %p238 = pneg %p172
        %p239 = pneg %p169
        %s240 = sand.u32 %s159, 1
        %s241 = scalar_lea.sflag [#allocation3], %s240
        %s242 = sand.u32 %s159, 1
        %s243 = smul.addr %s242, 16
        %s244 = scalar_lea.vmem [#allocation2], %s243
        %p245 = scmp.lt.s32.totalorder %s20, 1
        %s246 = scalar_select %p245, %s20, 1
        %s247 = smul.addr %s246, 2
        %s248 = smul.addr %s247, 2
        %s249 = scalar_lea.vmem %s0, %s248
        %v251 = vld [vmem:[%s1] sm:$0xf]
        %v252 = vld [vmem:[%s1 + $0x4] sm:$0xf]
        %v253 = vld [vmem:[%s249] sm:$0xf]
        %v254 = vld [vmem:[%s2] sm:$0xff]
        %v255 = vld [vmem:[%s2 + $0x8] sm:$0xff]
        %257 = vset.pattern.permute.xlu0 0
        %258 = vperm.xlu0 %257, %v254
        %v259 = vpop.permute.xlu0 %258
        %262 = vset.pattern.permute.xlu0 0
        %263 = vperm.xlu0 %262, %v255
        %v264 = vpop.permute.xlu0 %263
        %v268 = vunpack.c.l.b16 %v251
        %v269 = vunpack.c.l.b16 %v252
        %v270 = vpack.c.b16 %v269, %v268
        %v273 = vunpack.c.l.s4 1983009808
        %v274 = vunpack.c.0.s8 %v273
        %v275 = vlaneseq
        %v276 = vshrl.u32 %v275, 7
        %v277 = vsub.s32 %v274, %v276
        %v278 = vrot.slane %v253, %v277
        %v279 = vcombine.high %v278, %v278
        %vm280 = vcmask 31744
        %v282 = vsel %vm280, %v270, 0
        %vm284 = vcmask 1041408
        %v286 = vsel %vm284, %v278, 0
        %v289 = vsel %vm284, %v279, 0
        %291 = vmatprep.subr.bf16.mxu0 0
        %292 = vmatpush1.bf16.msra.mxu0 0
        %293 = vmatprep.subr.bf16.mxu0 0
        %294 = vmatpush1.bf16.msra.mxu0 0
        %295 = vmatprep.subr.bf16.mxu0 0
        %296 = vmatpush1.bf16.msra.mxu0 0
        %297 = vmatprep.subr.bf16.mxu0 0
        %298 = vmatpush1.bf16.msra.mxu0 0
        %299 = vmatprep.subr.bf16.mxu0 0
        %300 = vmatpush1.bf16.msra.mxu0 0
        %301 = vmatprep.subr.bf16.mxu0 0
        %302 = vmatpush1.bf16.msra.mxu0 0
        %303 = vmatprep.subr.bf16.mxu0 0
        %304 = vmatpush1.bf16.msra.mxu0 0
        %305 = vmatprep.subr.bf16.mxu0 %v289
        %306 = vmatpush1.bf16.msra.mxu0 %v286
        %307 = vmatprep.subr.bf16.mxu0 0
        %308 = vmatpush2.bf16.msra.mxu0 0
        %309 = vmatprep.subr.bf16.mxu0 0
        %310 = vmatpush2.bf16.msra.mxu0 0
        %311 = vmatprep.subr.bf16.mxu0 0
        %312 = vmatpush2.bf16.msra.mxu0 0
        %313 = vmatprep.subr.bf16.mxu0 0
        %314 = vmatpush2.bf16.msra.mxu0 0
        %315 = vmatprep.subr.bf16.mxu0 0
        %316 = vmatpush2.bf16.msra.mxu0 0
        %317 = vmatprep.subr.bf16.mxu0 0
        %318 = vmatpush2.bf16.msra.mxu0 0
        %319 = vmatprep.subr.bf16.mxu0 0
        %320 = vmatpush2.bf16.msra.mxu0 0
        %321 = vmatprep.subr.bf16.mxu0 0
        %322 = vmatpush2.bf16.msra.mxu0 0
        %323 = vmatprep.mubr.bf16.mxu0 0
        %324 = vmatmul.mubr.bf16.gmra.mxu0 %v282
        %v325 = vpop.f32.mrf.mxu0
        %v326 = vadd.f32 %v259, %v325
        %v327 = vpop.f32.mrf.mxu0
        %v328 = vadd.f32 %v259, %v327
        %v329 = vpop.f32.mrf.mxu0
        %v330 = vadd.f32 %v264, %v329
        %v331 = vpop.f32.mrf.mxu0
        %v332 = vadd.f32 %v264, %v331
        %333 = vdwg.mxu0
        %v334 = vmax.f32 %v326, 0.0
        %v335 = vmax.f32 %v328, 0.0
        %v336 = vmax.f32 %v330, 0.0
        %v337 = vmax.f32 %v332, 0.0
        %v338 = vld [vmem:[%s5] sm:$0x3]
        %v339 = vld [vmem:[%s5 + $0x2] sm:$0x3]
        %v340 = vld [vmem:[%s5 + $0x4] sm:$0x3]
        %v341 = vld [vmem:[%s5 + $0x6] sm:$0x3]
        %v342 = vld [vmem:[%s5 + $0xa] sm:$0x3]
        %v343 = vld [vmem:[%s5 + $0xc] sm:$0x3]
        %v344 = vld [vmem:[%s5 + $0xe] sm:$0x3]
        %v345 = vld [vmem:[%s5 + $0x10] sm:$0x3]
        %347 = vrot.lane.b32.xlu0 %v335, 17
        %v348 = vpop.permute.xlu0 %347
        %351 = vrot.lane.b32.xlu0 %v334, 17
        %v352 = vpop.permute.xlu0 %351
        %vm353 = vcmask 138240
        %v354 = vsel %vm353, %v352, %v348
        %v357 = vsel %vm353, %v348, %v352
        %v359 = vlaneseq
        %v360 = vshrl.u32 %v359, 7
        %v361 = vsub.s32 0, %v360
        %v362 = vrot.slane %v338, %v361
        %v363 = vlaneseq
        %v364 = vshrl.u32 %v363, 7
        %v365 = vsub.s32 1, %v364
        %v366 = vrot.slane %v338, %v365
        %v369 = vmul.f32 %v357, %v362
        %v370 = vmul.f32 %v354, %v366
        %371 = vrot.lane.b32.xlu0 %v335, 16
        %v372 = vpop.permute.xlu0 %371
        %374 = vrot.lane.b32.xlu0 %v334, 16
        %v375 = vpop.permute.xlu0 %374
        %vm376 = vcmask 130048
        %v377 = vsel %vm376, %v375, %v372
        %v380 = vsel %vm376, %v372, %v375
        %v382 = vlaneseq
        %v383 = vshrl.u32 %v382, 7
        %v384 = vsub.s32 0, %v383
        %v385 = vrot.slane %v339, %v384
        %v386 = vlaneseq
        %v387 = vshrl.u32 %v386, 7
        %v388 = vsub.s32 1, %v387
        %v389 = vrot.slane %v339, %v388
        %v392 = vmul.f32 %v380, %v385
        %v393 = vmul.f32 %v377, %v389
        %394 = vrot.lane.b32.xlu0 %v335, 15
        %v395 = vpop.permute.xlu0 %394
        %397 = vrot.lane.b32.xlu0 %v334, 15
        %v398 = vpop.permute.xlu0 %397
        %vm399 = vcmask 121856
        %v400 = vsel %vm399, %v398, %v395
        %v403 = vsel %vm399, %v395, %v398
        %v405 = vlaneseq
        %v406 = vshrl.u32 %v405, 7
        %v407 = vsub.s32 0, %v406
        %v408 = vrot.slane %v340, %v407
        %v409 = vlaneseq
        %v410 = vshrl.u32 %v409, 7
        %v411 = vsub.s32 1, %v410
        %v412 = vrot.slane %v340, %v411
        %v415 = vmul.f32 %v403, %v408
        %v416 = vmul.f32 %v400, %v412
        %417 = vrot.lane.b32.xlu0 %v335, 1
        %v418 = vpop.permute.xlu0 %417
        %420 = vrot.lane.b32.xlu0 %v334, 1
        %v421 = vpop.permute.xlu0 %420
        %vm422 = vcmask 7168
        %v423 = vsel %vm422, %v421, %v418
        %v426 = vsel %vm422, %v418, %v421
        %v428 = vlaneseq
        %v429 = vshrl.u32 %v428, 7
        %v430 = vsub.s32 0, %v429
        %v431 = vrot.slane %v341, %v430
        %v432 = vlaneseq
        %v433 = vshrl.u32 %v432, 7
        %v434 = vsub.s32 1, %v433
        %v435 = vrot.slane %v341, %v434
        %v438 = vmul.f32 %v426, %v431
        %v439 = vmul.f32 %v423, %v435
        %440 = vrot.lane.b32.xlu0 %v334, 127
        %v441 = vpop.permute.xlu0 %440
        %442 = vrot.lane.b32.xlu0 %v335, 127
        %v443 = vpop.permute.xlu0 %442
        %vm444 = vcmask 1039360
        %v445 = vsel %vm444, %v441, %v443
        %v449 = vsel %vm444, %v443, %v441
        %v451 = vlaneseq
        %v452 = vshrl.u32 %v451, 7
        %v453 = vsub.s32 0, %v452
        %v454 = vrot.slane %v342, %v453
        %v455 = vlaneseq
        %v456 = vshrl.u32 %v455, 7
        %v457 = vsub.s32 1, %v456
        %v458 = vrot.slane %v342, %v457
        %v461 = vmul.f32 %v445, %v454
        %v462 = vmul.f32 %v449, %v458
        %463 = vrot.lane.b32.xlu0 %v334, 113
        %v464 = vpop.permute.xlu0 %463
        %465 = vrot.lane.b32.xlu0 %v335, 113
        %v466 = vpop.permute.xlu0 %465
        %vm467 = vcmask 924672
        %v468 = vsel %vm467, %v464, %v466
        %v472 = vsel %vm467, %v466, %v464
        %v474 = vlaneseq
        %v475 = vshrl.u32 %v474, 7
        %v476 = vsub.s32 0, %v475
        %v477 = vrot.slane %v343, %v476
        %v478 = vlaneseq
        %v479 = vshrl.u32 %v478, 7
        %v480 = vsub.s32 1, %v479
        %v481 = vrot.slane %v343, %v480
        %v484 = vmul.f32 %v468, %v477
        %v485 = vmul.f32 %v472, %v481
        %486 = vrot.lane.b32.xlu0 %v334, 112
        %v487 = vpop.permute.xlu0 %486
        %488 = vrot.lane.b32.xlu0 %v335, 112
        %v489 = vpop.permute.xlu0 %488
        %vm490 = vcmask 916480
        %v491 = vsel %vm490, %v487, %v489
        %v495 = vsel %vm490, %v489, %v487
        %v497 = vlaneseq
        %v498 = vshrl.u32 %v497, 7
        %v499 = vsub.s32 0, %v498
        %v500 = vrot.slane %v344, %v499
        %v501 = vlaneseq
        %v502 = vshrl.u32 %v501, 7
        %v503 = vsub.s32 1, %v502
        %v504 = vrot.slane %v344, %v503
        %v507 = vmul.f32 %v491, %v500
        %v508 = vmul.f32 %v495, %v504
        %509 = vrot.lane.b32.xlu0 %v334, 111
        %v510 = vpop.permute.xlu0 %509
        %511 = vrot.lane.b32.xlu0 %v335, 111
        %v512 = vpop.permute.xlu0 %511
        %vm513 = vcmask 908288
        %v514 = vsel %vm513, %v510, %v512
        %v518 = vsel %vm513, %v512, %v510
        %v520 = vlaneseq
        %v521 = vshrl.u32 %v520, 7
        %v522 = vsub.s32 0, %v521
        %v523 = vrot.slane %v345, %v522
        %v524 = vlaneseq
        %v525 = vshrl.u32 %v524, 7
        %v526 = vsub.s32 1, %v525
        %v527 = vrot.slane %v345, %v526
        %v530 = vmul.f32 %v514, %v523
        %v531 = vmul.f32 %v518, %v527
        %v532 = vld [vmem:[%s3] sm:$0xf]
        %v533 = vpack.c.bf16 %v392, %v369
        %v534 = vpack.c.bf16 %v393, %v370
        %v535 = vpack.c.bf16 %v438, %v415
        %v536 = vpack.c.bf16 %v439, %v416
        %v537 = vpack.c.bf16 %v461, %v334
        %v538 = vpack.c.bf16 %v462, %v335
        %v539 = vpack.c.bf16 %v507, %v484
        %v540 = vpack.c.bf16 %v508, %v485
        %v541 = vpack.c.bf16 %v530, %v530
        %v542 = vpack.c.bf16 %v531, %v531
        %v543 = vld [vmem:[%s4] sm:$0xff]
        %545 = vset.pattern.permute.xlu0 0
        %546 = vperm.xlu0 %545, %v543
        %v547 = vpop.permute.xlu0 %546
        %vm549 = vcmask 588800
        %v551 = vsel %vm549, %v532, 0
        %vm553 = vcmask 1043456
        %v555 = vsel %vm553, %v541, 0
        %v558 = vsel %vm553, %v542, 0
        %560 = vmatprep.subr.bf16.mxu0 0
        %561 = vmatpush1.bf16.msra.mxu0 0
        %562 = vmatprep.subr.bf16.mxu0 0
        %563 = vmatpush1.bf16.msra.mxu0 0
        %564 = vmatprep.subr.bf16.mxu0 0
        %565 = vmatpush1.bf16.msra.mxu0 0
        %566 = vmatprep.subr.bf16.mxu0 %v558
        %567 = vmatpush1.bf16.msra.mxu0 %v555
        %568 = vmatprep.subr.bf16.mxu0 %v540
        %569 = vmatpush1.bf16.msra.mxu0 %v539
        %570 = vmatprep.subr.bf16.mxu0 %v538
        %571 = vmatpush1.bf16.msra.mxu0 %v537
        %572 = vmatprep.subr.bf16.mxu0 %v536
        %573 = vmatpush1.bf16.msra.mxu0 %v535
        %574 = vmatprep.subr.bf16.mxu0 %v534
        %575 = vmatpush1.bf16.msra.mxu0 %v533
        %576 = vmatprep.subr.bf16.mxu0 0
        %577 = vmatpush2.bf16.msra.mxu0 0
        %578 = vmatprep.subr.bf16.mxu0 0
        %579 = vmatpush2.bf16.msra.mxu0 0
        %580 = vmatprep.subr.bf16.mxu0 0
        %581 = vmatpush2.bf16.msra.mxu0 0
        %582 = vmatprep.subr.bf16.mxu0 0
        %583 = vmatpush2.bf16.msra.mxu0 0
        %584 = vmatprep.subr.bf16.mxu0 0
        %585 = vmatpush2.bf16.msra.mxu0 0
        %586 = vmatprep.subr.bf16.mxu0 0
        %587 = vmatpush2.bf16.msra.mxu0 0
        %588 = vmatprep.subr.bf16.mxu0 0
        %589 = vmatpush2.bf16.msra.mxu0 0
        %590 = vmatprep.subr.bf16.mxu0 0
        %591 = vmatpush2.bf16.msra.mxu0 0
        %592 = vmatprep.mubr.bf16.mxu0 0
        %593 = vmatmul.mubr.bf16.gmra.mxu0 %v551
        %v594 = vpop.f32.mrf.mxu0
        %v595 = vadd.f32 %v547, %v594
        %v596 = vpop.f32.mrf.mxu0
        %v597 = vadd.f32 %v547, %v596
        %v598 = vpop.f32.mrf.mxu0
        %v599 = vpop.f32.mrf.mxu0
        %600 = vdwg.mxu0
        %v601 = vmax.f32 %v595, 0.0
        %v602 = vmax.f32 %v597, 0.0
        %604 = vrot.lane.b32.xlu0 %v602, 17
        %v605 = vpop.permute.xlu0 %604
        %608 = vrot.lane.b32.xlu0 %v601, 17
        %v609 = vpop.permute.xlu0 %608
        %v610 = vsel %vm353, %v609, %v605
        %v613 = vsel %vm353, %v605, %v609
        %v614 = vmul.f32 %v613, %v362
        %v615 = vmul.f32 %v610, %v366
        %616 = vrot.lane.b32.xlu0 %v602, 16
        %v617 = vpop.permute.xlu0 %616
        %619 = vrot.lane.b32.xlu0 %v601, 16
        %v620 = vpop.permute.xlu0 %619
        %v621 = vsel %vm376, %v620, %v617
        %v624 = vsel %vm376, %v617, %v620
        %v625 = vmul.f32 %v624, %v385
        %v626 = vmul.f32 %v621, %v389
        %627 = vrot.lane.b32.xlu0 %v602, 15
        %v628 = vpop.permute.xlu0 %627
        %630 = vrot.lane.b32.xlu0 %v601, 15
        %v631 = vpop.permute.xlu0 %630
        %v632 = vsel %vm399, %v631, %v628
        %v635 = vsel %vm399, %v628, %v631
        %v636 = vmul.f32 %v635, %v408
        %v637 = vmul.f32 %v632, %v412
        %638 = vrot.lane.b32.xlu0 %v602, 1
        %v639 = vpop.permute.xlu0 %638
        %641 = vrot.lane.b32.xlu0 %v601, 1
        %v642 = vpop.permute.xlu0 %641
        %v643 = vsel %vm422, %v642, %v639
        %v646 = vsel %vm422, %v639, %v642
        %v647 = vmul.f32 %v646, %v431
        %v648 = vmul.f32 %v643, %v435
        %649 = vrot.lane.b32.xlu0 %v601, 127
        %v650 = vpop.permute.xlu0 %649
        %651 = vrot.lane.b32.xlu0 %v602, 127
        %v652 = vpop.permute.xlu0 %651
        %v653 = vsel %vm444, %v650, %v652
        %v657 = vsel %vm444, %v652, %v650
        %v658 = vmul.f32 %v653, %v454
        %v659 = vmul.f32 %v657, %v458
        %660 = vrot.lane.b32.xlu0 %v601, 113
        %v661 = vpop.permute.xlu0 %660
        %662 = vrot.lane.b32.xlu0 %v602, 113
        %v663 = vpop.permute.xlu0 %662
        %v664 = vsel %vm467, %v661, %v663
        %v668 = vsel %vm467, %v663, %v661
        %v669 = vmul.f32 %v664, %v477
        %v670 = vmul.f32 %v668, %v481
        %671 = vrot.lane.b32.xlu0 %v601, 112
        %v672 = vpop.permute.xlu0 %671
        %673 = vrot.lane.b32.xlu0 %v602, 112
        %v674 = vpop.permute.xlu0 %673
        %v675 = vsel %vm490, %v672, %v674
        %v679 = vsel %vm490, %v674, %v672
        %v680 = vmul.f32 %v675, %v500
        %v681 = vmul.f32 %v679, %v504
        %682 = vrot.lane.b32.xlu0 %v601, 111
        %v683 = vpop.permute.xlu0 %682
        %684 = vrot.lane.b32.xlu0 %v602, 111
        %v685 = vpop.permute.xlu0 %684
        %v686 = vsel %vm513, %v683, %v685
        %v690 = vsel %vm513, %v685, %v683
        %v691 = vmul.f32 %v686, %v523
        %v692 = vmul.f32 %v690, %v527
        %s693 = scalar_lea.vmem %s3, 4
        %v694 = vld [vmem:[%s693] sm:$0xf]
        %v695 = vpack.c.bf16 %v625, %v614
        %v696 = vpack.c.bf16 %v626, %v615
        %v697 = vpack.c.bf16 %v647, %v636
        %v698 = vpack.c.bf16 %v648, %v637
        %v699 = vpack.c.bf16 %v658, %v601
        %v700 = vpack.c.bf16 %v659, %v602
        %v701 = vpack.c.bf16 %v680, %v669
        %v702 = vpack.c.bf16 %v681, %v670
        %v703 = vpack.c.bf16 %v691, %v691
        %v704 = vpack.c.bf16 %v692, %v692
        %s705 = scalar_lea.vmem %s4, 8
        %v706 = vld [vmem:[%s705] sm:$0xff]
        %708 = vset.pattern.permute.xlu0 0
        %709 = vperm.xlu0 %708, %v706
        %v710 = vpop.permute.xlu0 %709
        %v713 = vsel %vm549, %v694, 0
        %v716 = vsel %vm553, %v703, 0
        %v719 = vsel %vm553, %v704, 0
        %721 = vmatprep.subr.bf16.mxu0 0
        %722 = vmatpush1.bf16.msra.mxu0 0
        %723 = vmatprep.subr.bf16.mxu0 0
        %724 = vmatpush1.bf16.msra.mxu0 0
        %725 = vmatprep.subr.bf16.mxu0 0
        %726 = vmatpush1.bf16.msra.mxu0 0
        %727 = vmatprep.subr.bf16.mxu0 %v719
        %728 = vmatpush1.bf16.msra.mxu0 %v716
        %729 = vmatprep.subr.bf16.mxu0 %v702
        %730 = vmatpush1.bf16.msra.mxu0 %v701
        %731 = vmatprep.subr.bf16.mxu0 %v700
        %732 = vmatpush1.bf16.msra.mxu0 %v699
        %733 = vmatprep.subr.bf16.mxu0 %v698
        %734 = vmatpush1.bf16.msra.mxu0 %v697
        %735 = vmatprep.subr.bf16.mxu0 %v696
        %736 = vmatpush1.bf16.msra.mxu0 %v695
        %737 = vmatprep.subr.bf16.mxu0 0
        %738 = vmatpush2.bf16.msra.mxu0 0
        %739 = vmatprep.subr.bf16.mxu0 0
        %740 = vmatpush2.bf16.msra.mxu0 0
        %741 = vmatprep.subr.bf16.mxu0 0
        %742 = vmatpush2.bf16.msra.mxu0 0
        %743 = vmatprep.subr.bf16.mxu0 0
        %744 = vmatpush2.bf16.msra.mxu0 0
        %745 = vmatprep.subr.bf16.mxu0 0
        %746 = vmatpush2.bf16.msra.mxu0 0
        %747 = vmatprep.subr.bf16.mxu0 0
        %748 = vmatpush2.bf16.msra.mxu0 0
        %749 = vmatprep.subr.bf16.mxu0 0
        %750 = vmatpush2.bf16.msra.mxu0 0
        %751 = vmatprep.subr.bf16.mxu0 0
        %752 = vmatpush2.bf16.msra.mxu0 0
        %753 = vmatprep.mubr.bf16.mxu0 0
        %754 = vmatmul.mubr.bf16.gmra.mxu0 %v713
        %v755 = vpop.f32.mrf.mxu0
        %v756 = vadd.f32 %v710, %v755
        %v757 = vpop.f32.mrf.mxu0
        %v758 = vadd.f32 %v710, %v757
        %v759 = vpop.f32.mrf.mxu0
        %v760 = vpop.f32.mrf.mxu0
        %761 = vdwg.mxu0
        %v762 = vmax.f32 %v756, 0.0
        %v763 = vmax.f32 %v758, 0.0
        %765 = vrot.lane.b32.xlu0 %v763, 17
        %v766 = vpop.permute.xlu0 %765
        %769 = vrot.lane.b32.xlu0 %v762, 17
        %v770 = vpop.permute.xlu0 %769
        %v771 = vsel %vm353, %v770, %v766
        %v774 = vsel %vm353, %v766, %v770
        %v775 = vmul.f32 %v774, %v362
        %v776 = vmul.f32 %v771, %v366
        %777 = vrot.lane.b32.xlu0 %v763, 16
        %v778 = vpop.permute.xlu0 %777
        %780 = vrot.lane.b32.xlu0 %v762, 16
        %v781 = vpop.permute.xlu0 %780
        %v782 = vsel %vm376, %v781, %v778
        %v785 = vsel %vm376, %v778, %v781
        %v786 = vmul.f32 %v785, %v385
        %v787 = vmul.f32 %v782, %v389
        %788 = vrot.lane.b32.xlu0 %v763, 15
        %v789 = vpop.permute.xlu0 %788
        %791 = vrot.lane.b32.xlu0 %v762, 15
        %v792 = vpop.permute.xlu0 %791
        %v793 = vsel %vm399, %v792, %v789
        %v796 = vsel %vm399, %v789, %v792
        %v797 = vmul.f32 %v796, %v408
        %v798 = vmul.f32 %v793, %v412
        %799 = vrot.lane.b32.xlu0 %v763, 1
        %v800 = vpop.permute.xlu0 %799
        %802 = vrot.lane.b32.xlu0 %v762, 1
        %v803 = vpop.permute.xlu0 %802
        %v804 = vsel %vm422, %v803, %v800
        %v807 = vsel %vm422, %v800, %v803
        %v808 = vmul.f32 %v807, %v431
        %v809 = vmul.f32 %v804, %v435
        %810 = vrot.lane.b32.xlu0 %v762, 127
        %v811 = vpop.permute.xlu0 %810
        %812 = vrot.lane.b32.xlu0 %v763, 127
        %v813 = vpop.permute.xlu0 %812
        %v814 = vsel %vm444, %v811, %v813
        %v818 = vsel %vm444, %v813, %v811
        %v819 = vmul.f32 %v814, %v454
        %v820 = vmul.f32 %v818, %v458
        %821 = vrot.lane.b32.xlu0 %v762, 113
        %v822 = vpop.permute.xlu0 %821
        %823 = vrot.lane.b32.xlu0 %v763, 113
        %v824 = vpop.permute.xlu0 %823
        %v825 = vsel %vm467, %v822, %v824
        %v829 = vsel %vm467, %v824, %v822
        %v830 = vmul.f32 %v825, %v477
        %v831 = vmul.f32 %v829, %v481
        %832 = vrot.lane.b32.xlu0 %v762, 112
        %v833 = vpop.permute.xlu0 %832
        %834 = vrot.lane.b32.xlu0 %v763, 112
        %v835 = vpop.permute.xlu0 %834
        %v836 = vsel %vm490, %v833, %v835
        %v840 = vsel %vm490, %v835, %v833
        %v841 = vmul.f32 %v836, %v500
        %v842 = vmul.f32 %v840, %v504
        %843 = vrot.lane.b32.xlu0 %v762, 111
        %v844 = vpop.permute.xlu0 %843
        %845 = vrot.lane.b32.xlu0 %v763, 111
        %v846 = vpop.permute.xlu0 %845
        %v847 = vsel %vm513, %v844, %v846
        %v851 = vsel %vm513, %v846, %v844
        %v852 = vmul.f32 %v847, %v523
        %v853 = vmul.f32 %v851, %v527
        %s854 = scalar_lea.vmem %s3, 8
        %v855 = vld [vmem:[%s854] sm:$0xf]
        %v856 = vpack.c.bf16 %v786, %v775
        %v857 = vpack.c.bf16 %v787, %v776
        %v858 = vpack.c.bf16 %v808, %v797
        %v859 = vpack.c.bf16 %v809, %v798
        %v860 = vpack.c.bf16 %v819, %v762
        %v861 = vpack.c.bf16 %v820, %v763
        %v862 = vpack.c.bf16 %v841, %v830
        %v863 = vpack.c.bf16 %v842, %v831
        %v864 = vpack.c.bf16 %v852, %v852
        %v865 = vpack.c.bf16 %v853, %v853
        %s866 = scalar_lea.vmem %s4, 16
        %v867 = vld [vmem:[%s866] sm:$0xff]
        %869 = vset.pattern.permute.xlu0 0
        %870 = vperm.xlu0 %869, %v867
        %v871 = vpop.permute.xlu0 %870
        %v874 = vsel %vm549, %v855, 0
        %v877 = vsel %vm553, %v864, 0
        %v880 = vsel %vm553, %v865, 0
        %882 = vmatprep.subr.bf16.mxu0 0
        %883 = vmatpush1.bf16.msra.mxu0 0
        %884 = vmatprep.subr.bf16.mxu0 0
        %885 = vmatpush1.bf16.msra.mxu0 0
        %886 = vmatprep.subr.bf16.mxu0 0
        %887 = vmatpush1.bf16.msra.mxu0 0
        %888 = vmatprep.subr.bf16.mxu0 %v880
        %889 = vmatpush1.bf16.msra.mxu0 %v877
        %890 = vmatprep.subr.bf16.mxu0 %v863
        %891 = vmatpush1.bf16.msra.mxu0 %v862
        %892 = vmatprep.subr.bf16.mxu0 %v861
        %893 = vmatpush1.bf16.msra.mxu0 %v860
        %894 = vmatprep.subr.bf16.mxu0 %v859
        %895 = vmatpush1.bf16.msra.mxu0 %v858
        %896 = vmatprep.subr.bf16.mxu0 %v857
        %897 = vmatpush1.bf16.msra.mxu0 %v856
        %898 = vmatprep.subr.bf16.mxu0 0
        %899 = vmatpush2.bf16.msra.mxu0 0
        %900 = vmatprep.subr.bf16.mxu0 0
        %901 = vmatpush2.bf16.msra.mxu0 0
        %902 = vmatprep.subr.bf16.mxu0 0
        %903 = vmatpush2.bf16.msra.mxu0 0
        %904 = vmatprep.subr.bf16.mxu0 0
        %905 = vmatpush2.bf16.msra.mxu0 0
        %906 = vmatprep.subr.bf16.mxu0 0
        %907 = vmatpush2.bf16.msra.mxu0 0
        %908 = vmatprep.subr.bf16.mxu0 0
        %909 = vmatpush2.bf16.msra.mxu0 0
        %910 = vmatprep.subr.bf16.mxu0 0
        %911 = vmatpush2.bf16.msra.mxu0 0
        %912 = vmatprep.subr.bf16.mxu0 0
        %913 = vmatpush2.bf16.msra.mxu0 0
        %914 = vmatprep.mubr.bf16.mxu0 0
        %915 = vmatmul.mubr.bf16.gmra.mxu0 %v874
        %v916 = vpop.f32.mrf.mxu0
        %v917 = vadd.f32 %v871, %v916
        %v918 = vpop.f32.mrf.mxu0
        %v919 = vadd.f32 %v871, %v918
        %v920 = vpop.f32.mrf.mxu0
        %v921 = vpop.f32.mrf.mxu0
        %922 = vdwg.mxu0
        %v923 = vmax.f32 %v917, 0.0
        %v924 = vmax.f32 %v919, 0.0
        %v925 = vadd.f32 %v923, %v336
        %v926 = vadd.f32 %v924, %v337
        %927 = vst [vmem:[%s244] sm:$0xff] %v925
        %928 = vst [vmem:[%s244 + $0x8] sm:$0xff] %v926
        %s929 = sand.u32 %s159, 1
        %s930 = scalar_lea.sflag [#allocation3], %s929
        %s931 = sand.u32 %s159, 1
        %s932 = smul.addr %s931, 16
        %s933 = scalar_lea.vmem [#allocation2], %s932
        // Predicated region
        $region45: #{tpu_custom_call.1} parent=43 // pred_check
          %p934 = pneg %p169
        $region46: #{tpu_custom_call.1} parent=43 // pred_check_branch
          %936 = sbr.rel (%p934) target = $region48
        $region47: #{tpu_custom_call.1} parent=43 // pred_region
          %s938 = ssub.s32 256, 256
          %939 = vsyncadd %s930, %s938
          %s940 = smul.addr %s20, 2
          %s941 = smul.addr %s940, 128
          %s942 = scalar_lea.hbm %s6, %s941
          %s944 = sshll.u32 %s933, 4
          %s945 = int_to_ptr.vmem [resolvable:$true] %s944
          %947 = dma.vmem_to_hbm [thread:$0]  %s945, 256, %s942, %s930
        $region48: #{tpu_custom_call.1} parent=43 // pred_fallthru
          _
      $region44: #{tpu_custom_call.1} parent=5 // pred_fallthru
        _
      %p948 = scmp.le.s32.totalorder 2, %s15
      // Predicated region
      $region49: #{tpu_custom_call.1} parent=5 // pred_check
        %p949 = pneg %p948
      $region50: #{tpu_custom_call.1} parent=5 // pred_check_branch
        %951 = sbr.rel (%p949) target = $region52
      $region51: #{tpu_custom_call.1} parent=5 // pred_region
        %s952 = ssub.s32 %s15, 2
        // Predicated region
        $region53: #{tpu_custom_call.1} parent=51 // pred_check
          %p953 = pneg %p175
        $region54: #{tpu_custom_call.1} parent=51 // pred_check_branch
          %955 = sbr.rel (%p953) target = $region56
        $region55: #{tpu_custom_call.1} parent=51 // pred_region
          %s956 = sand.u32 %s160, 1
          %s957 = scalar_lea.sflag [#allocation3], %s956
          %s958 = sand.u32 %s160, 1
          %s959 = smul.addr %s958, 16
          %s960 = scalar_lea.vmem [#allocation2], %s959
          %961 = dma.done %s957, 256
        $region56: #{tpu_custom_call.1} parent=51 // pred_fallthru
          _
      $region52: #{tpu_custom_call.1} parent=5 // pred_fallthru
        _
    $region6: #{tpu_custom_call.1} parent=1 // loop_footer
      %s19 = sadd.s32 1, %s15
    $region7: #{tpu_custom_call.1} parent=1 // loop_footer_branch
      %14 = sbr.rel target = $region3
    $region8: #{tpu_custom_call.1} parent=1 // loop_exit
      _
    %962 = vsyncpa [#allocation3], 1
    %s963 = scalar_lea.sflag [#allocation3], 1
    %964 = vsyncpa %s963, 1

</llo_original>
